<compile_context>
chip_gen: v5e
topology: v5e:2x2
jax: 0.10.0
libtpu: 0.0.40
codegen_flags: <defaults>
</compile_context>

<pallas_src>
import math
from functools import partial

import jax
import jax.numpy as jnp
from jax.experimental import pallas as pl
from jax.experimental.pallas import tpu as pltpu


# ------------------------------ kernels ------------------------------

def _noisy_linear_kernel(x_ref, ein_ref, wmu_ref, wsig_ref, eout_ref, b_ref, o_ref):
    """Training mode, factorised noise.

    out = x @ mu.T + eps_out * ((x * eps_in) @ sigma.T) + (bias_mu + bias_sigma*bias_eps)
    Weights arrive pre-transposed: wmu_ref / wsig_ref are (tk, tn) tiles of (In_pad, Out_pad).
    Grid = (Out tiles [parallel], K tiles [reduction]); output block is resident across K.
    """
    k = pl.program_id(1)

    @pl.when(k == 0)
    def _():
        o_ref[...] = jnp.zeros_like(o_ref)

    x = x_ref[...]                                    # (B_pad, tk) f32
    xe = x * ein_ref[...]                             # scale by eps_in row (1, tk)
    part_mu = jnp.dot(x, wmu_ref[...], preferred_element_type=jnp.float32)
    part_sig = jnp.dot(xe, wsig_ref[...], preferred_element_type=jnp.float32)
    o_ref[...] += part_mu + eout_ref[...] * part_sig  # eps_out row (1, tn)

    @pl.when(k == pl.num_programs(1) - 1)
    def _():
        o_ref[...] += b_ref[...]


def _mu_linear_kernel(x_ref, wmu_ref, b_ref, o_ref):
    """Eval mode: out = x @ mu.T + bias_mu (no sigma / eps HBM traffic at all)."""
    k = pl.program_id(1)

    @pl.when(k == 0)
    def _():
        o_ref[...] = jnp.zeros_like(o_ref)

    o_ref[...] += jnp.dot(x_ref[...], wmu_ref[...],
                          preferred_element_type=jnp.float32)

    @pl.when(k == pl.num_programs(1) - 1)
    def _():
        o_ref[...] += b_ref[...]


# --------------------------- tiling helpers ---------------------------

def _round_up(x, m):
    return ((x + m - 1) // m) * m


def _choose_tiles(out_features, in_features, tn_pref, tk_pref):
    out_pad = _round_up(out_features, 128)
    in_pad = _round_up(in_features, 128)
    tn = min(tn_pref, out_pad)
    tk = min(tk_pref, in_pad)
    # v7x has 2 TensorCores: keep >= 2 tiles along the "parallel" Out axis when
    # Out is large enough, otherwise one core would idle.
    if out_pad >= 256 and out_pad // tn < 2:
        tn = max(128, ((out_pad // 2) // 128) * 128)
    out_pad = _round_up(out_pad, tn)
    in_pad = _round_up(in_pad, tk)
    return tn, tk, out_pad, in_pad


# --------------------------- param handling ---------------------------

def _scale_noise(key, size):
    x = jax.random.normal(key, (size,), dtype=jnp.float32)
    return jnp.sign(x) * jnp.sqrt(jnp.abs(x))


def init_noisy_linear(key, in_features, out_features, std_init=0.4):
    """Mirrors NoisyLinear.reset_parameters() + reset_noise() (factorised form)."""
    k_wmu, k_bmu, k_ein, k_eout, k_beps = jax.random.split(key, 5)
    mu_range = 1.0 / math.sqrt(in_features)

    weight_mu = jax.random.uniform(k_wmu, (out_features, in_features),
                                   minval=-mu_range, maxval=mu_range,
                                   dtype=jnp.float32)
    weight_sigma = jnp.full((out_features, in_features),
                            std_init / math.sqrt(in_features), dtype=jnp.float32)
    bias_mu = jax.random.uniform(k_bmu, (out_features,),
                                 minval=-mu_range, maxval=mu_range,
                                 dtype=jnp.float32)
    bias_sigma = jnp.full((out_features,),
                          std_init / math.sqrt(out_features), dtype=jnp.float32)

    eps_in = _scale_noise(k_ein, in_features)      # weight_epsilon == outer(eps_out, eps_in)
    eps_out = _scale_noise(k_eout, out_features)
    bias_epsilon = _scale_noise(k_beps, out_features)

    return dict(weight_mu=weight_mu, weight_sigma=weight_sigma,
                eps_in=eps_in, eps_out=eps_out,
                bias_mu=bias_mu, bias_sigma=bias_sigma, bias_epsilon=bias_epsilon)


def prepare_noisy_linear(raw, tn_pref=512, tk_pref=2048):
    """One-time: pad + transpose the weight matrices so the jit'd forward never
    copies them again. Zero K-padding (plus zero-padded x) keeps the reduction exact."""
    out_features, in_features = raw["weight_mu"].shape
    tn, tk, out_pad, in_pad = _choose_tiles(out_features, in_features, tn_pref, tk_pref)

    def pad_t(w):  # (Out, In) -> zero-padded, transposed (In_pad, Out_pad)
        w = jnp.pad(w, ((0, out_pad - out_features), (0, in_pad - in_features)))
        return jnp.asarray(w.T)

    return dict(
        weight_mu_t=pad_t(raw["weight_mu"]),
        weight_sigma_t=pad_t(raw["weight_sigma"]),
        eps_in=raw["eps_in"], eps_out=raw["eps_out"],
        bias_mu=raw["bias_mu"], bias_sigma=raw["bias_sigma"],
        bias_epsilon=raw["bias_epsilon"],
        out_features=out_features, in_features=in_features,
        tn=tn, tk=tk,
    )


# ------------------------------ forward ------------------------------

@partial(jax.jit, static_argnames=("training", "out_features", "tn", "tk"))
def _forward_pallas(x, wmu_t, wsig_t, eps_in, eps_out, bias_mu, bias_sigma,
                    bias_epsilon, *, training, out_features, tn, tk):
    x = x.astype(jnp.float32)
    B, in_features = x.shape
    in_pad, out_pad = wmu_t.shape
    B_pad = _round_up(max(B, 8), 8)

    # Only the small per-call tensors are padded inside the jit.
    x_p = jnp.pad(x, ((0, B_pad - B), (0, in_pad - in_features)))
    bias_eff = bias_mu + bias_sigma * bias_epsilon if training else bias_mu
    bias_p = jnp.pad(bias_eff, (0, out_pad - out_features)).reshape(1, out_pad)

    grid = (out_pad // tn, in_pad // tk)   # (Out tiles [parallel], K tiles [reduction])

    x_spec = pl.BlockSpec((B_pad, tk), lambda o, k: (0, k))
    w_spec = pl.BlockSpec((tk, tn), lambda o, k: (k, o))
    row_n_spec = pl.BlockSpec((1, tn), lambda o, k: (0, o))
    row_k_spec = pl.BlockSpec((1, tk), lambda o, k: (0, k))
    out_spec = pl.BlockSpec((B_pad, tn), lambda o, k: (0, o))

    compiler_params = pltpu.CompilerParams(
        dimension_semantics=("parallel", "arbitrary"),
        # 48 MiB: above v5e's 16 MiB scoped default, below v7x's 64 MiB VMEM.
        vmem_limit_bytes=48 * 1024 * 1024,
    )
    out_shape = jax.ShapeDtypeStruct((B_pad, out_pad), jnp.float32)

    if training:
        ein_p = jnp.pad(eps_in, (0, in_pad - in_features)).reshape(1, in_pad)
        eout_p = jnp.pad(eps_out, (0, out_pad - out_features)).reshape(1, out_pad)
        out = pl.pallas_call(
            _noisy_linear_kernel,
            out_shape=out_shape,
            grid=grid,
            in_specs=[x_spec, row_k_spec, w_spec, w_spec, row_n_spec, row_n_spec],
            out_specs=out_spec,
            compiler_params=compiler_params,
        )(x_p, ein_p, wmu_t, wsig_t, eout_p, bias_p)
    else:
        out = pl.pallas_call(
            _mu_linear_kernel,
            out_shape=out_shape,
            grid=grid,
            in_specs=[x_spec, w_spec, row_n_spec],
            out_specs=out_spec,
            compiler_params=compiler_params,
        )(x_p, wmu_t, bias_p)

    return out[:B, :out_features]


@partial(jax.jit, static_argnames=("training", "out_features", "in_features"))
def _forward_xla(x, wmu_t, wsig_t, eps_in, eps_out, bias_mu, bias_sigma,
                 bias_epsilon, *, training, out_features, in_features):
    """Small-problem fallback: let XLA's fused GEMM handle tiny layers."""
    x = x.astype(jnp.float32)
    wmu = wmu_t[:in_features, :out_features]
    if training:
        wsig = wsig_t[:in_features, :out_features]
        bias = bias_mu + bias_sigma * bias_epsilon
        return x @ wmu + eps_out[None, :] * ((x * eps_in[None, :]) @ wsig) + bias
    return x @ wmu + bias_mu


def noisy_linear(x, state, training=True, force_pallas=False):
    """NoisyLinear.forward. `state` comes from prepare_noisy_linear()."""
    args = (x, state["weight_mu_t"], state["weight_sigma_t"], state["eps_in"],
            state["eps_out"], state["bias_mu"], state["bias_sigma"],
            state["bias_epsilon"])
    small = state["out_features"] * state["in_features"] < (1 << 20)
    if small and not force_pallas:
        return _forward_xla(*args, training=training,
                            out_features=state["out_features"],
                            in_features=state["in_features"])
    return _forward_pallas(*args, training=training,
                           out_features=state["out_features"],
                           tn=state["tn"], tk=state["tk"])


# ------------------------------ reference ------------------------------

def reference_forward(x, raw, training=True):
    if training:
        w = raw["weight_mu"] + raw["weight_sigma"] * jnp.outer(raw["eps_out"], raw["eps_in"])
        b = raw["bias_mu"] + raw["bias_sigma"] * raw["bias_epsilon"]
    else:
        w, b = raw["weight_mu"], raw["bias_mu"]
    return x @ w.T + b


if __name__ == "__main__":
    key = jax.random.PRNGKey(0)
    k1, k2, k3, k4 = jax.random.split(key, 4)

    # MXU default precision on TPU may use bf16 passes for f32 operands; both the
    # kernel and the jnp reference are affected, so tolerances are mildly relaxed.
    TOL = dict(atol=2e-2, rtol=2e-2)

    # --- case 1: aligned shapes; small tile prefs force a (2 Out x 2 K) grid,
    #             exercising the K accumulator and the parallel Out axis. ---
    B, In, Out = 8, 256, 256
    raw = init_noisy_linear(k1, In, Out, std_init=0.4)
    state = prepare_noisy_linear(raw, tn_pref=128, tk_pref=128)
    x = jax.random.normal(k2, (B, In), dtype=jnp.float32)

    out_train = jax.block_until_ready(noisy_linear(x, state, training=True, force_pallas=True))
    assert out_train.shape == (B, Out)
    assert jnp.allclose(out_train, reference_forward(x, raw, True), **TOL)

    out_eval = jax.block_until_ready(noisy_linear(x, state, training=False, force_pallas=True))
    assert jnp.allclose(out_eval, reference_forward(x, raw, False), **TOL)

    # --- case 2: unaligned shapes (padding + output slicing path), default tiles ---
    B2, In2, Out2 = 5, 200, 72
    raw2 = init_noisy_linear(k3, In2, Out2, std_init=0.4)
    state2 = prepare_noisy_linear(raw2)
    x2 = jax.random.normal(k4, (B2, In2), dtype=jnp.float32)

    out2 = jax.block_until_ready(noisy_linear(x2, state2, training=True, force_pallas=True))
    assert out2.shape == (B2, Out2)
    assert jnp.allclose(out2, reference_forward(x2, raw2, True), **TOL)

    # --- case 3: tiny-layer XLA fallback path ---
    out3 = jax.block_until_ready(noisy_linear(x2, state2, training=True))
    assert jnp.allclose(out3, reference_forward(x2, raw2, True), **TOL)

    print("KERNEL_OK")
</pallas_src>

<mosaic_0001>
module attributes {stable_mosaic.version = 11 : i64} {
  func.func @_noisy_linear_kernel(%arg0: i32, %arg1: i32, %arg2: memref<8x128xf32, #tpu.memory_space<vmem>>, %arg3: memref<1x128xf32, #tpu.memory_space<vmem>>, %arg4: memref<128x128xf32, #tpu.memory_space<vmem>>, %arg5: memref<128x128xf32, #tpu.memory_space<vmem>>, %arg6: memref<1x128xf32, #tpu.memory_space<vmem>>, %arg7: memref<1x128xf32, #tpu.memory_space<vmem>>, %arg8: memref<8x128xf32, #tpu.memory_space<vmem>>) attributes {dimension_semantics = [#tpu.dimension_semantics<parallel>, #tpu.dimension_semantics<arbitrary>], iteration_bounds = array<i64: 2, 2>, scalar_prefetch = 0 : i64, scratch_operands = 0 : i64, tpu.core_type = #tpu.core_type<tc>, window_params = [{transform_indices = @transform_0, window_bounds = array<i64: 8, 128>}, {transform_indices = @transform_1, window_bounds = array<i64: 1, 128>}, {transform_indices = @transform_2, window_bounds = array<i64: 128, 128>}, {transform_indices = @transform_3, window_bounds = array<i64: 128, 128>}, {transform_indices = @transform_4, window_bounds = array<i64: 1, 128>}, {transform_indices = @transform_5, window_bounds = array<i64: 1, 128>}, {transform_indices = @transform_6, window_bounds = array<i64: 8, 128>}]} {
    %c0_i32 = arith.constant 0 : i32
    %0 = arith.cmpi eq, %arg1, %c0_i32 : i32
    %1 = arith.extui %0 : i1 to i32
    %c0_i32_0 = arith.constant 0 : i32
    %2 = arith.cmpi ne, %1, %c0_i32_0 : i32
    scf.if %2 {
      %cst_16 = arith.constant 0.000000e+00 : f32
      %21 = vector.broadcast %cst_16 : f32 to vector<8x128xf32>
      %c0_17 = arith.constant 0 : index
      %c0_18 = arith.constant 0 : index
      %22 = vector.load %arg8[%c0_17, %c0_18] : memref<8x128xf32, #tpu.memory_space<vmem>>, vector<8x128xf32>
      tpu.vector_store %arg8[%c0_17, %c0_18], %21 {strides = array<i32>} : memref<8x128xf32, #tpu.memory_space<vmem>>, vector<8x128xf32>,
    } else {
    }
    %c0 = arith.constant 0 : index
    %c0_1 = arith.constant 0 : index
    %3 = vector.load %arg2[%c0, %c0_1] : memref<8x128xf32, #tpu.memory_space<vmem>>, vector<8x128xf32>
    %c0_2 = arith.constant 0 : index
    %c0_3 = arith.constant 0 : index
    %4 = vector.load %arg3[%c0_2, %c0_3] : memref<1x128xf32, #tpu.memory_space<vmem>>, vector<1x128xf32>
    %5 = vector.broadcast %4 : vector<1x128xf32> to vector<8x128xf32>
    %6 = arith.mulf %3, %5 : vector<8x128xf32>
    %c0_4 = arith.constant 0 : index
    %c0_5 = arith.constant 0 : index
    %7 = vector.load %arg4[%c0_4, %c0_5] : memref<128x128xf32, #tpu.memory_space<vmem>>, vector<128x128xf32>
    %cst = arith.constant dense<0.000000e+00> : vector<8x128xf32>
    %8 = tpu.matmul %3, %7, %cst {dimension_numbers = #tpu.dot_dimension_numbers<[1], [0], [0], [1], [0, 0, 1, 1], [], []>} : vector<8x128xf32>, vector<128x128xf32>, vector<8x128xf32> -> vector<8x128xf32>
    %c0_6 = arith.constant 0 : index
    %c0_7 = arith.constant 0 : index
    %9 = vector.load %arg5[%c0_6, %c0_7] : memref<128x128xf32, #tpu.memory_space<vmem>>, vector<128x128xf32>
    %cst_8 = arith.constant dense<0.000000e+00> : vector<8x128xf32>
    %10 = tpu.matmul %6, %9, %cst_8 {dimension_numbers = #tpu.dot_dimension_numbers<[1], [0], [0], [1], [0, 0, 1, 1], [], []>} : vector<8x128xf32>, vector<128x128xf32>, vector<8x128xf32> -> vector<8x128xf32>
    %c0_9 = arith.constant 0 : index
    %c0_10 = arith.constant 0 : index
    %11 = vector.load %arg8[%c0_9, %c0_10] : memref<8x128xf32, #tpu.memory_space<vmem>>, vector<8x128xf32>
    %c0_11 = arith.constant 0 : index
    %c0_12 = arith.constant 0 : index
    %12 = vector.load %arg6[%c0_11, %c0_12] : memref<1x128xf32, #tpu.memory_space<vmem>>, vector<1x128xf32>
    %13 = vector.broadcast %12 : vector<1x128xf32> to vector<8x128xf32>
    %14 = arith.mulf %13, %10 : vector<8x128xf32>
    %15 = arith.addf %8, %14 : vector<8x128xf32>
    %16 = arith.addf %11, %15 : vector<8x128xf32>
    %c0_13 = arith.constant 0 : index
    %c0_14 = arith.constant 0 : index
    %17 = vector.load %arg8[%c0_13, %c0_14] : memref<8x128xf32, #tpu.memory_space<vmem>>, vector<8x128xf32>
    tpu.vector_store %arg8[%c0_13, %c0_14], %16 {strides = array<i32>} : memref<8x128xf32, #tpu.memory_space<vmem>>, vector<8x128xf32>,
    %c1_i32 = arith.constant 1 : i32
    %18 = arith.cmpi eq, %arg1, %c1_i32 : i32
    %19 = arith.extui %18 : i1 to i32
    %c0_i32_15 = arith.constant 0 : i32
    %20 = arith.cmpi ne, %19, %c0_i32_15 : i32
    scf.if %20 {
      %c0_16 = arith.constant 0 : index
      %c0_17 = arith.constant 0 : index
      %21 = vector.load %arg8[%c0_16, %c0_17] : memref<8x128xf32, #tpu.memory_space<vmem>>, vector<8x128xf32>
      %c0_18 = arith.constant 0 : index
      %c0_19 = arith.constant 0 : index
      %22 = vector.load %arg7[%c0_18, %c0_19] : memref<1x128xf32, #tpu.memory_space<vmem>>, vector<1x128xf32>
      %23 = vector.broadcast %22 : vector<1x128xf32> to vector<8x128xf32>
      %24 = arith.addf %21, %23 : vector<8x128xf32>
      %c0_20 = arith.constant 0 : index
      %c0_21 = arith.constant 0 : index
      %25 = vector.load %arg8[%c0_20, %c0_21] : memref<8x128xf32, #tpu.memory_space<vmem>>, vector<8x128xf32>
      tpu.vector_store %arg8[%c0_20, %c0_21], %24 {strides = array<i32>} : memref<8x128xf32, #tpu.memory_space<vmem>>, vector<8x128xf32>,
    } else {
    }
    return
  }
  func.func @transform_0(%arg0: i32, %arg1: i32) -> (i32, i32) {
    %c0_i32 = arith.constant 0 : i32
    %c0_i32_0 = arith.constant 0 : i32
    return %c0_i32, %arg1 : i32, i32
  }
  func.func @transform_1(%arg0: i32, %arg1: i32) -> (i32, i32) {
    %c0_i32 = arith.constant 0 : i32
    %c0_i32_0 = arith.constant 0 : i32
    return %c0_i32, %arg1 : i32, i32
  }
  func.func @transform_2(%arg0: i32, %arg1: i32) -> (i32, i32) {
    %c0_i32 = arith.constant 0 : i32
    return %arg1, %arg0 : i32, i32
  }
  func.func @transform_3(%arg0: i32, %arg1: i32) -> (i32, i32) {
    %c0_i32 = arith.constant 0 : i32
    return %arg1, %arg0 : i32, i32
  }
  func.func @transform_4(%arg0: i32, %arg1: i32) -> (i32, i32) {
    %c0_i32 = arith.constant 0 : i32
    %c0_i32_0 = arith.constant 0 : i32
    return %c0_i32, %arg0 : i32, i32
  }
  func.func @transform_5(%arg0: i32, %arg1: i32) -> (i32, i32) {
    %c0_i32 = arith.constant 0 : i32
    %c0_i32_0 = arith.constant 0 : i32
    return %c0_i32, %arg0 : i32, i32
  }
  func.func @transform_6(%arg0: i32, %arg1: i32) -> (i32, i32) {
    %c0_i32 = arith.constant 0 : i32
    %c0_i32_0 = arith.constant 0 : i32
    return %c0_i32, %arg0 : i32, i32
  }
}

</mosaic_0001>

<llo_original>
// kernel: _forward_pallas.1
$region0: #{_forward_pallas.1}
  #allocation0 [shape = 'u32[]', space=smem, size = 0x4, offset = 0x4, fixed_abs, tag = 'smem constant byte address 0x4 - core index']
  #allocation1 [shape = 'u32[72,128]{1,0:T(1,128)}', space=vmem, size = 0x9000, scoped, tag = 'internal scratch']
  %s0 = inlined_call_operand.hbm [shape: f32[8,256], index: 0, kind: input, shape index: {}]
  %s1 = inlined_call_operand.vmem [shape: f32[1,256], index: 1, kind: input, shape index: {}]
  %s2 = inlined_call_operand.hbm [shape: f32[256,256], index: 2, kind: input, shape index: {}]
  %s3 = inlined_call_operand.hbm [shape: f32[256,256], index: 3, kind: input, shape index: {}]
  %s4 = inlined_call_operand.vmem [shape: f32[1,256], index: 4, kind: input, shape index: {}]
  %s5 = inlined_call_operand.vmem [shape: f32[1,256], index: 5, kind: input, shape index: {}]
  %s6 = inlined_call_operand.hbm [shape: f32[8,256], index: 6, kind: output, shape index: {}]
  %s7 = sld [smem:[#allocation0]]
  $region77: #{_forward_pallas.1} parent=0
    _
  %s9 = ssub.s32 1, %s7
  %s10 = scalar_select 0, %s9, %s7
  $region1: #{_forward_pallas.1} parent=0
    #allocation2 [shape = 'u8[8192]{0}', space=vmem, size = 0x2000, scoped, tag = 'input window, operand 0']
    #allocation3 [shape = 's32[2]{0}', space=sflag, size = 0x8, scoped, tag = 'scoped memory for _forward_pallas.1']
    #allocation4 [shape = 's32[2]{0}', space=sflag, size = 0x8, scoped, tag = 'scoped memory for _forward_pallas.1']
    #allocation5 [shape = 'u8[131072]{0}', space=vmem, size = 0x20000, scoped, tag = 'input window, operand 2']
    #allocation6 [shape = 's32[2]{0}', space=sflag, size = 0x8, scoped, tag = 'scoped memory for _forward_pallas.1']
    #allocation7 [shape = 'u8[131072]{0}', space=vmem, size = 0x20000, scoped, tag = 'input window, operand 3']
    #allocation8 [shape = 'u8[8192]{0}', space=vmem, size = 0x2000, scoped, tag = 'output window, operand 0']
    %11 = vsyncpa [#allocation3], 0
    %s12 = scalar_lea.sflag [#allocation3], 1
    %13 = vsyncpa %s12, 0
    %14 = vsyncpa [#allocation6], 0
    %s15 = scalar_lea.sflag [#allocation6], 1
    %16 = vsyncpa %s15, 0
    %17 = vsyncpa [#allocation4], 0
    %s18 = scalar_lea.sflag [#allocation4], 1
    %19 = vsyncpa %s18, 0
    loop: start=0, step=1, limit=6
    $region2: #{_forward_pallas.1} parent=1 // loop_pre_header
      _
    $region3: #{_forward_pallas.1} parent=1 // loop_header
      %s21 = sphi 0, %s25
      %p22 = scmp.ge.s32.totalorder %s21, 6
      %s28 = sphi 0, %s40
      %s29 = sphi 0, %s36
      %s30 = sphi 0, %s28
      %s31 = sphi 0, %s29
      %s32 = sphi 0, %s30
      %s33 = sphi 0, %s31
      %s43 = sphi 0, %s45
      %s46 = sphi 0, %s43
      %s47 = sphi 0, %s46
      %s63 = sphi 0, %s47
      %s69 = sphi 0, %s71
      %s72 = sphi 0, %s69
      %s73 = sphi 0, %s72
      %s89 = sphi 0, %s73
      %s97 = sphi 0, %s99
      %s100 = sphi 0, %s97
      %s101 = sphi 0, %s100
      %s117 = sphi 0, %s101
      %s125 = sphi 0, %s127
      %s128 = sphi 0, %s125
      %s129 = sphi 0, %s128
      %s145 = sphi 0, %s129
      %s151 = sphi 0, %s153
      %s154 = sphi 0, %s151
      %s155 = sphi 0, %s154
      %s171 = sphi 0, %s155
      %s177 = sphi 0, %s179
      %s180 = sphi 0, %s177
      %s181 = sphi 0, %s180
      %s197 = sphi 0, %s181
      %s203 = sphi 0, %s205
      %s206 = sphi 0, %s203
      %s207 = sphi 0, %s206
      %s223 = sphi 0, %s207
    $region4: #{_forward_pallas.1} parent=1 // loop_header_branch
      %24 = sbr.rel (%p22) target = $region8
    $region5: #{_forward_pallas.1} parent=1 // loop_body
      %s26 = ssub.s32 %s21, 1
      %s27 = ssub.s32 %s21, 2
      %s34 = sadd.s32 1, %s29
      %p35 = scmp.ge.s32.totalorder %s34, 2
      %s36 = scalar_select %p35, 0, %s34
      %s37 = sadd.s32 1, %s28
      %s38 = scalar_select %p35, %s37, %s28
      %p39 = scmp.ge.s32.totalorder %s38, 2
      %s40 = scalar_select %p39, 0, %s38
      %s41 = ssub.s32 %s29, %s36
      %p42 = scmp.eq.s32.totalorder %s41, 0
      %s44 = sadd.s32 %s43, 1
      %s45 = scalar_select %p42, %s43, %s44
      %p48 = pneg %p42
      %p49 = scmp.eq.s32.totalorder %s21, 3
      %p50 = por %p48, %p49
      %p51 = scmp.ne.s32.totalorder %s43, %s46
      %p52 = scmp.eq.s32.totalorder %s21, 0
      %p53 = por %p51, %p52
      %p54 = scmp.ne.s32.totalorder %s43, %s46
      %p55 = scmp.eq.s32.totalorder %s26, 3
      %p56 = por %p54, %p55
      %p57 = scmp.ne.s32.totalorder %s46, %s47
      %p58 = scmp.eq.s32.totalorder %s26, 0
      %p59 = por %p57, %p58
      %p60 = scmp.ne.s32.totalorder %s46, %s47
      %p61 = scmp.eq.s32.totalorder %s27, 3
      %p62 = por %p60, %p61
      %p64 = scmp.ne.s32.totalorder %s47, %s63
      %p65 = scmp.eq.s32.totalorder %s27, 0
      %p66 = por %p64, %p65
      %s67 = ssub.s32 %s29, %s36
      %p68 = scmp.eq.s32.totalorder %s67, 0
      %s70 = sadd.s32 %s69, 1
      %s71 = scalar_select %p68, %s69, %s70
      %p74 = pneg %p68
      %p75 = scmp.eq.s32.totalorder %s21, 3
      %p76 = por %p74, %p75
      %p77 = scmp.ne.s32.totalorder %s69, %s72
      %p78 = scmp.eq.s32.totalorder %s21, 0
      %p79 = por %p77, %p78
      %p80 = scmp.ne.s32.totalorder %s69, %s72
      %p81 = scmp.eq.s32.totalorder %s26, 3
      %p82 = por %p80, %p81
      %p83 = scmp.ne.s32.totalorder %s72, %s73
      %p84 = scmp.eq.s32.totalorder %s26, 0
      %p85 = por %p83, %p84
      %p86 = scmp.ne.s32.totalorder %s72, %s73
      %p87 = scmp.eq.s32.totalorder %s27, 3
      %p88 = por %p86, %p87
      %p90 = scmp.ne.s32.totalorder %s73, %s89
      %p91 = scmp.eq.s32.totalorder %s27, 0
      %p92 = por %p90, %p91
      %s93 = ssub.s32 %s29, %s36
      %s94 = ssub.s32 %s28, %s40
      %s95 = sor.u32 %s93, %s94
      %p96 = scmp.eq.s32.totalorder %s95, 0
      %s98 = sadd.s32 %s97, 1
      %s99 = scalar_select %p96, %s97, %s98
      %p102 = pneg %p96
      %p103 = scmp.eq.s32.totalorder %s21, 3
      %p104 = por %p102, %p103
      %p105 = scmp.ne.s32.totalorder %s97, %s100
      %p106 = scmp.eq.s32.totalorder %s21, 0
      %p107 = por %p105, %p106
      %p108 = scmp.ne.s32.totalorder %s97, %s100
      %p109 = scmp.eq.s32.totalorder %s26, 3
      %p110 = por %p108, %p109
      %p111 = scmp.ne.s32.totalorder %s100, %s101
      %p112 = scmp.eq.s32.totalorder %s26, 0
      %p113 = por %p111, %p112
      %p114 = scmp.ne.s32.totalorder %s100, %s101
      %p115 = scmp.eq.s32.totalorder %s27, 3
      %p116 = por %p114, %p115
      %p118 = scmp.ne.s32.totalorder %s101, %s117
      %p119 = scmp.eq.s32.totalorder %s27, 0
      %p120 = por %p118, %p119
      %s121 = ssub.s32 %s29, %s36
      %s122 = ssub.s32 %s28, %s40
      %s123 = sor.u32 %s121, %s122
      %p124 = scmp.eq.s32.totalorder %s123, 0
      %s126 = sadd.s32 %s125, 1
      %s127 = scalar_select %p124, %s125, %s126
      %p130 = pneg %p124
      %p131 = scmp.eq.s32.totalorder %s21, 3
      %p132 = por %p130, %p131
      %p133 = scmp.ne.s32.totalorder %s125, %s128
      %p134 = scmp.eq.s32.totalorder %s21, 0
      %p135 = por %p133, %p134
      %p136 = scmp.ne.s32.totalorder %s125, %s128
      %p137 = scmp.eq.s32.totalorder %s26, 3
      %p138 = por %p136, %p137
      %p139 = scmp.ne.s32.totalorder %s128, %s129
      %p140 = scmp.eq.s32.totalorder %s26, 0
      %p141 = por %p139, %p140
      %p142 = scmp.ne.s32.totalorder %s128, %s129
      %p143 = scmp.eq.s32.totalorder %s27, 3
      %p144 = por %p142, %p143
      %p146 = scmp.ne.s32.totalorder %s129, %s145
      %p147 = scmp.eq.s32.totalorder %s27, 0
      %p148 = por %p146, %p147
      %s149 = ssub.s32 %s28, %s40
      %p150 = scmp.eq.s32.totalorder %s149, 0
      %s152 = sadd.s32 %s151, 1
      %s153 = scalar_select %p150, %s151, %s152
      %p156 = pneg %p150
      %p157 = scmp.eq.s32.totalorder %s21, 3
      %p158 = por %p156, %p157
      %p159 = scmp.ne.s32.totalorder %s151, %s154
      %p160 = scmp.eq.s32.totalorder %s21, 0
      %p161 = por %p159, %p160
      %p162 = scmp.ne.s32.totalorder %s151, %s154
      %p163 = scmp.eq.s32.totalorder %s26, 3
      %p164 = por %p162, %p163
      %p165 = scmp.ne.s32.totalorder %s154, %s155
      %p166 = scmp.eq.s32.totalorder %s26, 0
      %p167 = por %p165, %p166
      %p168 = scmp.ne.s32.totalorder %s154, %s155
      %p169 = scmp.eq.s32.totalorder %s27, 3
      %p170 = por %p168, %p169
      %p172 = scmp.ne.s32.totalorder %s155, %s171
      %p173 = scmp.eq.s32.totalorder %s27, 0
      %p174 = por %p172, %p173
      %s175 = ssub.s32 %s28, %s40
      %p176 = scmp.eq.s32.totalorder %s175, 0
      %s178 = sadd.s32 %s177, 1
      %s179 = scalar_select %p176, %s177, %s178
      %p182 = pneg %p176
      %p183 = scmp.eq.s32.totalorder %s21, 3
      %p184 = por %p182, %p183
      %p185 = scmp.ne.s32.totalorder %s177, %s180
      %p186 = scmp.eq.s32.totalorder %s21, 0
      %p187 = por %p185, %p186
      %p188 = scmp.ne.s32.totalorder %s177, %s180
      %p189 = scmp.eq.s32.totalorder %s26, 3
      %p190 = por %p188, %p189
      %p191 = scmp.ne.s32.totalorder %s180, %s181
      %p192 = scmp.eq.s32.totalorder %s26, 0
      %p193 = por %p191, %p192
      %p194 = scmp.ne.s32.totalorder %s180, %s181
      %p195 = scmp.eq.s32.totalorder %s27, 3
      %p196 = por %p194, %p195
      %p198 = scmp.ne.s32.totalorder %s181, %s197
      %p199 = scmp.eq.s32.totalorder %s27, 0
      %p200 = por %p198, %p199
      %s201 = ssub.s32 %s28, %s40
      %p202 = scmp.eq.s32.totalorder %s201, 0
      %s204 = sadd.s32 %s203, 1
      %s205 = scalar_select %p202, %s203, %s204
      %p208 = pneg %p202
      %p209 = scmp.eq.s32.totalorder %s21, 3
      %p210 = por %p208, %p209
      %p211 = scmp.ne.s32.totalorder %s203, %s206
      %p212 = scmp.eq.s32.totalorder %s21, 0
      %p213 = por %p211, %p212
      %p214 = scmp.ne.s32.totalorder %s203, %s206
      %p215 = scmp.eq.s32.totalorder %s26, 3
      %p216 = por %p214, %p215
      %p217 = scmp.ne.s32.totalorder %s206, %s207
      %p218 = scmp.eq.s32.totalorder %s26, 0
      %p219 = por %p217, %p218
      %p220 = scmp.ne.s32.totalorder %s206, %s207
      %p221 = scmp.eq.s32.totalorder %s27, 3
      %p222 = por %p220, %p221
      %p224 = scmp.ne.s32.totalorder %s207, %s223
      %p225 = scmp.eq.s32.totalorder %s27, 0
      %p226 = por %p224, %p225
      %p227 = scmp.le.s32.totalorder 1, %s21
      %p228 = scmp.lt.s32.totalorder %s21, 5
      %p229 = pnand %p227, %p228
      %p230 = pneg %p229
      // Predicated region
      $region9: #{_forward_pallas.1} parent=5 // pred_check
        _
      $region10: #{_forward_pallas.1} parent=5 // pred_check_branch
        %232 = sbr.rel (%p229) target = $region12
      $region11: #{_forward_pallas.1} parent=5 // pred_region
        %s233 = ssub.s32 %s21, 1
      $region12: #{_forward_pallas.1} parent=5 // pred_fallthru
        _
      %p234 = scmp.lt.s32.totalorder %s21, 4
      // Predicated region
      $region13: #{_forward_pallas.1} parent=5 // pred_check
        %p235 = pneg %p234
      $region14: #{_forward_pallas.1} parent=5 // pred_check_branch
        %237 = sbr.rel (%p235) target = $region16
      $region15: #{_forward_pallas.1} parent=5 // pred_region
        // Predicated region
        $region17: #{_forward_pallas.1} parent=15 // pred_check
          %p238 = pneg %p53
        $region18: #{_forward_pallas.1} parent=15 // pred_check_branch
          %240 = sbr.rel (%p238) target = $region20
        $region19: #{_forward_pallas.1} parent=15 // pred_region
          %s241 = sand.u32 %s43, 1
          %s242 = scalar_lea.sflag [#allocation3], %s241
          %s243 = sand.u32 %s43, 1
          %s244 = smul.addr %s243, 8
          %s245 = scalar_lea.vmem [#allocation2], %s244
          %247 = vsyncadd %s242, 0
          %s248 = smul.addr %s29, 8
          %s249 = scalar_lea.hbm %s0, %s248
          %s251 = sshll.u32 %s249, 4
          %s252 = int_to_ptr.hbm [resolvable:$true] %s251
          %s253 = sshll.u32 %s245, 4
          %s254 = int_to_ptr.vmem [resolvable:$true] %s253
          %256 = dma.hbm_to_vmem [thread:$0]  %s252, 128, %s254, %s242
        $region20: #{_forward_pallas.1} parent=15 // pred_fallthru
          _
        // Predicated region
        $region21: #{_forward_pallas.1} parent=15 // pred_check
          %p257 = pneg %p79
        $region22: #{_forward_pallas.1} parent=15 // pred_check_branch
          %259 = sbr.rel (%p257) target = $region24
        $region23: #{_forward_pallas.1} parent=15 // pred_region
          %p260 = scmp.lt.s32.totalorder %s29, 1
          %s261 = scalar_select %p260, %s29, 1
          %s262 = scalar_lea.vmem %s1, %s261
        $region24: #{_forward_pallas.1} parent=15 // pred_fallthru
          _
        // Predicated region
        $region25: #{_forward_pallas.1} parent=15 // pred_check
          %p263 = pneg %p107
        $region26: #{_forward_pallas.1} parent=15 // pred_check_branch
          %265 = sbr.rel (%p263) target = $region28
        $region27: #{_forward_pallas.1} parent=15 // pred_region
          %s266 = sand.u32 %s21, 1
          %s267 = scalar_lea.sflag [#allocation6], %s266
          %s268 = sand.u32 %s97, 1
          %s269 = smul.addr %s268, 128
          %s270 = scalar_lea.vmem [#allocation5], %s269
          %s271 = smul.u32 16, %s29
          %273 = vsyncadd %s267, 0
          %s274 = smul.addr %s271, 2
          %s275 = sadd.s32 %s28, %s274
          %s276 = smul.addr %s275, 8
          %s277 = scalar_lea.hbm %s2, %s276
          %s278 = sshll.u32 %s277, 4
          %s279 = int_to_ptr.hbm [resolvable:$true] %s278
          %s280 = sshll.u32 %s270, 4
          %s281 = int_to_ptr.vmem [resolvable:$true] %s280
          %286 = dma.hbm_to_vmem [thread:$0]  %s279, 2048, %s281, %s267, 256, 128, 8
        $region28: #{_forward_pallas.1} parent=15 // pred_fallthru
          _
        // Predicated region
        $region29: #{_forward_pallas.1} parent=15 // pred_check
          %p287 = pneg %p135
        $region30: #{_forward_pallas.1} parent=15 // pred_check_branch
          %289 = sbr.rel (%p287) target = $region32
        $region31: #{_forward_pallas.1} parent=15 // pred_region
          %s290 = sand.u32 %s21, 1
          %s291 = scalar_lea.sflag [#allocation6], %s290
          %s292 = sand.u32 %s125, 1
          %s293 = smul.addr %s292, 128
          %s294 = scalar_lea.vmem [#allocation7], %s293
          %s295 = smul.u32 16, %s29
          %297 = vsyncadd %s291, 0
          %s298 = smul.addr %s295, 2
          %s299 = sadd.s32 %s28, %s298
          %s300 = smul.addr %s299, 8
          %s301 = scalar_lea.hbm %s3, %s300
          %s302 = sshll.u32 %s301, 4
          %s303 = int_to_ptr.hbm [resolvable:$true] %s302
          %s304 = sshll.u32 %s294, 4
          %s305 = int_to_ptr.vmem [resolvable:$true] %s304
          %310 = dma.hbm_to_vmem [thread:$0]  %s303, 2048, %s305, %s291, 256, 128, 8
        $region32: #{_forward_pallas.1} parent=15 // pred_fallthru
          _
        // Predicated region
        $region33: #{_forward_pallas.1} parent=15 // pred_check
          %p311 = pneg %p161
        $region34: #{_forward_pallas.1} parent=15 // pred_check_branch
          %313 = sbr.rel (%p311) target = $region36
        $region35: #{_forward_pallas.1} parent=15 // pred_region
          %p314 = scmp.lt.s32.totalorder %s28, 1
          %s315 = scalar_select %p314, %s28, 1
          %s316 = scalar_lea.vmem %s4, %s315
        $region36: #{_forward_pallas.1} parent=15 // pred_fallthru
          _
        // Predicated region
        $region37: #{_forward_pallas.1} parent=15 // pred_check
          %p317 = pneg %p187
        $region38: #{_forward_pallas.1} parent=15 // pred_check_branch
          %319 = sbr.rel (%p317) target = $region40
        $region39: #{_forward_pallas.1} parent=15 // pred_region
          %p320 = scmp.lt.s32.totalorder %s28, 1
          %s321 = scalar_select %p320, %s28, 1
          %s322 = scalar_lea.vmem %s5, %s321
        $region40: #{_forward_pallas.1} parent=15 // pred_fallthru
          _
      $region16: #{_forward_pallas.1} parent=5 // pred_fallthru
        _
      %p323 = scmp.le.s32.totalorder 1, %s21
      %p324 = scmp.lt.s32.totalorder %s21, 5
      %p325 = pnand %p323, %p324
      %p326 = pneg %p325
      // Predicated region
      $region41: #{_forward_pallas.1} parent=5 // pred_check
        _
      $region42: #{_forward_pallas.1} parent=5 // pred_check_branch
        %328 = sbr.rel (%p325) target = $region44
      $region43: #{_forward_pallas.1} parent=5 // pred_region
        %s329 = ssub.s32 %s21, 1
        %s330 = sand.u32 %s46, 1
        %s331 = scalar_lea.sflag [#allocation3], %s330
        %s332 = sand.u32 %s46, 1
        %s333 = smul.addr %s332, 8
        %s334 = scalar_lea.vmem [#allocation2], %s333
        // Predicated region
        $region45: #{_forward_pallas.1} parent=43 // pred_check
          %p335 = pneg %p59
        $region46: #{_forward_pallas.1} parent=43 // pred_check_branch
          %337 = sbr.rel (%p335) target = $region48
        $region47: #{_forward_pallas.1} parent=43 // pred_region
          %339 = dma.done %s331, 128
        $region48: #{_forward_pallas.1} parent=43 // pred_fallthru
          _
        %s340 = sand.u32 %s26, 1
        %s341 = scalar_lea.sflag [#allocation6], %s340
        %s342 = sand.u32 %s100, 1
        %s343 = smul.addr %s342, 128
        %s344 = scalar_lea.vmem [#allocation5], %s343
        // Predicated region
        $region49: #{_forward_pallas.1} parent=43 // pred_check
          %p345 = pneg %p113
        $region50: #{_forward_pallas.1} parent=43 // pred_check_branch
          %347 = sbr.rel (%p345) target = $region52
        $region51: #{_forward_pallas.1} parent=43 // pred_region
          %349 = dma.done %s341, 2048
        $region52: #{_forward_pallas.1} parent=43 // pred_fallthru
          _
        %s350 = sand.u32 %s26, 1
        %s351 = scalar_lea.sflag [#allocation6], %s350
        %s352 = sand.u32 %s128, 1
        %s353 = smul.addr %s352, 128
        %s354 = scalar_lea.vmem [#allocation7], %s353
        // Predicated region
        $region53: #{_forward_pallas.1} parent=43 // pred_check
          %p355 = pneg %p141
        $region54: #{_forward_pallas.1} parent=43 // pred_check_branch
          %357 = sbr.rel (%p355) target = $region56
        $region55: #{_forward_pallas.1} parent=43 // pred_region
          %359 = dma.done %s351, 2048
        $region56: #{_forward_pallas.1} parent=43 // pred_fallthru
          _
        %s360 = sand.u32 %s46, 1
        %s361 = scalar_lea.sflag [#allocation3], %s360
        %s362 = sand.u32 %s46, 1
        %s363 = smul.addr %s362, 8
        %s364 = scalar_lea.vmem [#allocation2], %s363
        %p365 = pneg %p59
        %p366 = pneg %p56
        %p367 = scmp.lt.s32.totalorder %s31, 1
        %s368 = scalar_select %p367, %s31, 1
        %s369 = scalar_lea.vmem %s1, %s368
        %p370 = pneg %p85
        %p371 = pneg %p82
        %s372 = sand.u32 %s26, 1
        %s373 = scalar_lea.sflag [#allocation6], %s372
        %s374 = sand.u32 %s100, 1
        %s375 = smul.addr %s374, 128
        %s376 = scalar_lea.vmem [#allocation5], %s375
        %p377 = pneg %p113
        %p378 = pneg %p110
        %s379 = sand.u32 %s26, 1
        %s380 = scalar_lea.sflag [#allocation6], %s379
        %s381 = sand.u32 %s128, 1
        %s382 = smul.addr %s381, 128
        %s383 = scalar_lea.vmem [#allocation7], %s382
        %p384 = pneg %p141
        %p385 = pneg %p138
        %p386 = scmp.lt.s32.totalorder %s30, 1
        %s387 = scalar_select %p386, %s30, 1
        %s388 = scalar_lea.vmem %s4, %s387
        %p389 = pneg %p167
        %p390 = pneg %p164
        %p391 = scmp.lt.s32.totalorder %s30, 1
        %s392 = scalar_select %p391, %s30, 1
        %s393 = scalar_lea.vmem %s5, %s392
        %p394 = pneg %p193
        %p395 = pneg %p190
        %p396 = pneg %p219
        %p397 = pneg %p216
        %s398 = sand.u32 %s206, 1
        %s399 = scalar_lea.sflag [#allocation4], %s398
        %s400 = sand.u32 %s206, 1
        %s401 = smul.addr %s400, 8
        %s402 = scalar_lea.vmem [#allocation8], %s401
        %p403 = scmp.lt.s32.totalorder %s31, 1
        %s404 = scalar_select %p403, %s31, 1
        %s405 = scalar_lea.vmem %s1, %s404
        %s406 = smul.u32 16, %s31
        %s407 = smul.u32 16, %s31
        %p408 = scmp.lt.s32.totalorder %s30, 1
        %s409 = scalar_select %p408, %s30, 1
        %s410 = scalar_lea.vmem %s4, %s409
        %p411 = scmp.lt.s32.totalorder %s30, 1
        %s412 = scalar_select %p411, %s30, 1
        %s413 = scalar_lea.vmem %s5, %s412
        %p414 = scmp.eq.s32.totalorder %s31, 0
        // Predicated region
        $region57: #{_forward_pallas.1} parent=43 // pred_check
          %p415 = pneg %p414
        $region58: #{_forward_pallas.1} parent=43 // pred_check_branch
          %417 = sbr.rel (%p415) target = $region60
        $region59: #{_forward_pallas.1} parent=43 // pred_region
          %418 = vst [vmem:[%s402] sm:$0xff] 0.0
        $region60: #{_forward_pallas.1} parent=43 // pred_fallthru
          _
        %v419 = vld [vmem:[%s334] sm:$0xff]
        %v420 = vld [vmem:[%s405] sm:$0x1]
        %v422 = vperm.slane %v420, 0
        %v424 = vmul.f32 %v419, %v422
        %v425 = vld [vmem:[%s344] sm:$0xff]
        %v426 = vld [vmem:[%s344 + $0x8] sm:$0xff]
        %v427 = vld [vmem:[%s344 + $0x10] sm:$0xff]
        %v428 = vld [vmem:[%s344 + $0x18] sm:$0xff]
        %v429 = vld [vmem:[%s344 + $0x20] sm:$0xff]
        %v430 = vld [vmem:[%s344 + $0x28] sm:$0xff]
        %v431 = vld [vmem:[%s344 + $0x30] sm:$0xff]
        %v432 = vld [vmem:[%s344 + $0x38] sm:$0xff]
        %v433 = vld [vmem:[%s344 + $0x40] sm:$0xff]
        %v434 = vld [vmem:[%s344 + $0x48] sm:$0xff]
        %v435 = vld [vmem:[%s344 + $0x50] sm:$0xff]
        %v436 = vld [vmem:[%s344 + $0x58] sm:$0xff]
        %v437 = vld [vmem:[%s344 + $0x60] sm:$0xff]
        %v438 = vld [vmem:[%s344 + $0x68] sm:$0xff]
        %v439 = vld [vmem:[%s344 + $0x70] sm:$0xff]
        %v440 = vld [vmem:[%s344 + $0x78] sm:$0xff]
        %v441 = vld [vmem:[%s354] sm:$0xff]
        %v442 = vld [vmem:[%s354 + $0x8] sm:$0xff]
        %v443 = vld [vmem:[%s354 + $0x10] sm:$0xff]
        %v444 = vld [vmem:[%s354 + $0x18] sm:$0xff]
        %v445 = vld [vmem:[%s354 + $0x20] sm:$0xff]
        %v446 = vld [vmem:[%s354 + $0x28] sm:$0xff]
        %v447 = vld [vmem:[%s354 + $0x30] sm:$0xff]
        %v448 = vld [vmem:[%s354 + $0x38] sm:$0xff]
        %v449 = vld [vmem:[%s354 + $0x40] sm:$0xff]
        %v450 = vld [vmem:[%s354 + $0x48] sm:$0xff]
        %v451 = vld [vmem:[%s354 + $0x50] sm:$0xff]
        %v452 = vld [vmem:[%s354 + $0x58] sm:$0xff]
        %v453 = vld [vmem:[%s354 + $0x60] sm:$0xff]
        %v454 = vld [vmem:[%s354 + $0x68] sm:$0xff]
        %v455 = vld [vmem:[%s354 + $0x70] sm:$0xff]
        %v456 = vld [vmem:[%s354 + $0x78] sm:$0xff]
        %457 = vmatpush.msra.mxu0 %v456
        %458 = vmatpush.msra.mxu0 %v455
        %459 = vmatpush.msra.mxu0 %v454
        %460 = vmatpush.msra.mxu0 %v453
        %461 = vmatpush.msra.mxu0 %v452
        %462 = vmatpush.msra.mxu0 %v451
        %463 = vmatpush.msra.mxu0 %v450
        %464 = vmatpush.msra.mxu0 %v449
        %465 = vmatpush.msra.mxu0 %v448
        %466 = vmatpush.msra.mxu0 %v447
        %467 = vmatpush.msra.mxu0 %v446
        %468 = vmatpush.msra.mxu0 %v445
        %469 = vmatpush.msra.mxu0 %v444
        %470 = vmatpush.msra.mxu0 %v443
        %471 = vmatpush.msra.mxu0 %v442
        %472 = vmatpush.msra.mxu0 %v441
        %473 = vmatmul.f32.gmra.mxu0 %v424
        %v474 = vpop.f32.mrf.mxu0
        %v475 = vadd.f32 0.0, %v474
        %476 = vdwg.mxu0
        %v477 = vld [vmem:[%s402] sm:$0xff]
        %v478 = vld [vmem:[%s410] sm:$0x1]
        %v480 = vperm.slane %v478, 0
        %v482 = vmul.f32 %v480, %v475
        %483 = vmatpush.msra.mxu0 %v440
        %484 = vmatpush.msra.mxu0 %v439
        %485 = vmatpush.msra.mxu0 %v438
        %486 = vmatpush.msra.mxu0 %v437
        %487 = vmatpush.msra.mxu0 %v436
        %488 = vmatpush.msra.mxu0 %v435
        %489 = vmatpush.msra.mxu0 %v434
        %490 = vmatpush.msra.mxu0 %v433
        %491 = vmatpush.msra.mxu0 %v432
        %492 = vmatpush.msra.mxu0 %v431
        %493 = vmatpush.msra.mxu0 %v430
        %494 = vmatpush.msra.mxu0 %v429
        %495 = vmatpush.msra.mxu0 %v428
        %496 = vmatpush.msra.mxu0 %v427
        %497 = vmatpush.msra.mxu0 %v426
        %498 = vmatpush.msra.mxu0 %v425
        %499 = vmatmul.f32.gmra.mxu0 %v419
        %v500 = vpop.f32.mrf.mxu0
        %v501 = vadd.f32 %v482, %v500
        %502 = vdwg.mxu0
        %v503 = vadd.f32 %v477, %v501
        %504 = vst [vmem:[%s402] sm:$0xff] %v503
        %p505 = scmp.eq.s32.totalorder %s31, 1
        // Predicated region
        $region61: #{_forward_pallas.1} parent=43 // pred_check
          %p506 = pneg %p505
        $region62: #{_forward_pallas.1} parent=43 // pred_check_branch
          %508 = sbr.rel (%p506) target = $region64
        $region63: #{_forward_pallas.1} parent=43 // pred_region
          %v509 = vld [vmem:[%s402] sm:$0xff]
          %v510 = vld [vmem:[%s413] sm:$0x1]
          %v512 = vperm.slane %v510, 0
          %v514 = vadd.f32 %v509, %v512
          %515 = vst [vmem:[%s402] sm:$0xff] %v514
        $region64: #{_forward_pallas.1} parent=43 // pred_fallthru
          _
        %s516 = sand.u32 %s206, 1
        %s517 = scalar_lea.sflag [#allocation4], %s516
        %s518 = sand.u32 %s206, 1
        %s519 = smul.addr %s518, 8
        %s520 = scalar_lea.vmem [#allocation8], %s519
        // Predicated region
        $region65: #{_forward_pallas.1} parent=43 // pred_check
          %p521 = pneg %p216
        $region66: #{_forward_pallas.1} parent=43 // pred_check_branch
          %523 = sbr.rel (%p521) target = $region68
        $region67: #{_forward_pallas.1} parent=43 // pred_region
          %525 = vsyncadd %s517, 0
          %s526 = smul.addr %s30, 8
          %s527 = scalar_lea.hbm %s6, %s526
          %s529 = sshll.u32 %s520, 4
          %s530 = int_to_ptr.vmem [resolvable:$true] %s529
          %s531 = sshll.u32 %s527, 4
          %s532 = int_to_ptr.hbm [resolvable:$true] %s531
          %534 = dma.vmem_to_hbm [thread:$0]  %s530, 128, %s532, %s517
        $region68: #{_forward_pallas.1} parent=43 // pred_fallthru
          _
      $region44: #{_forward_pallas.1} parent=5 // pred_fallthru
        _
      %p535 = scmp.le.s32.totalorder 2, %s21
      // Predicated region
      $region69: #{_forward_pallas.1} parent=5 // pred_check
        %p536 = pneg %p535
      $region70: #{_forward_pallas.1} parent=5 // pred_check_branch
        %538 = sbr.rel (%p536) target = $region72
      $region71: #{_forward_pallas.1} parent=5 // pred_region
        %s539 = ssub.s32 %s21, 2
        // Predicated region
        $region73: #{_forward_pallas.1} parent=71 // pred_check
          %p540 = pneg %p222
        $region74: #{_forward_pallas.1} parent=71 // pred_check_branch
          %542 = sbr.rel (%p540) target = $region76
        $region75: #{_forward_pallas.1} parent=71 // pred_region
          %s543 = sand.u32 %s207, 1
          %s544 = scalar_lea.sflag [#allocation4], %s543
          %s545 = sand.u32 %s207, 1
          %s546 = smul.addr %s545, 8
          %s547 = scalar_lea.vmem [#allocation8], %s546
          %549 = dma.done %s544, 128
        $region76: #{_forward_pallas.1} parent=71 // pred_fallthru
          _
      $region72: #{_forward_pallas.1} parent=5 // pred_fallthru
        _
    $region6: #{_forward_pallas.1} parent=1 // loop_footer
      %s25 = sadd.s32 1, %s21
    $region7: #{_forward_pallas.1} parent=1 // loop_footer_branch
      %20 = sbr.rel target = $region3
    $region8: #{_forward_pallas.1} parent=1 // loop_exit
      _
    %550 = vsyncpa [#allocation3], 1
    %s551 = scalar_lea.sflag [#allocation3], 1
    %552 = vsyncpa %s551, 1
    %553 = vsyncpa [#allocation6], 1
    %s554 = scalar_lea.sflag [#allocation6], 1
    %555 = vsyncpa %s554, 1
    %556 = vsyncpa [#allocation4], 1
    %s557 = scalar_lea.sflag [#allocation4], 1
    %558 = vsyncpa %s557, 1

</llo_original>
